<compile_context>
chip_gen: v5e
topology: v5e:2x2
jax: 0.10.0
libtpu: 0.0.40
codegen_flags: <defaults>
</compile_context>

<pallas_src>
import functools

import jax
import jax.numpy as jnp
from jax.experimental import pallas as pl
from jax.experimental.pallas import tpu as pltpu

_LANES = 128
_ACC_SUBLANES = 8  # f32 vreg sublane count (accumulator is one f32 vreg)


def _hloss_kernel(x_ref, o_ref, acc_ref, *, block_rows, valid_rows,
                  blocks_per_core, num_valid_blocks, has_tail, has_skip):
    c = pl.program_id(0)              # partial-sum / core axis ("parallel")
    i = pl.program_id(1)              # row-block reduction axis ("arbitrary")
    g = c * blocks_per_core + i       # global row-block index

    @pl.when(i == 0)
    def _():
        acc_ref[...] = jnp.zeros_like(acc_ref)

    def accumulate(xv):
        p = xv * jnp.log(xv)
        # (block_rows,128) -> (block_rows//8, 8, 128) summed over axis 0 is a
        # layout-preserving elementwise vreg add-tree: pure VALU, no XLU, and
        # no (block_rows,128) accumulator read-modify-write.
        acc_ref[...] += p.reshape(
            block_rows // _ACC_SUBLANES, _ACC_SUBLANES, _LANES
        ).sum(axis=0)

    x = x_ref[...].astype(jnp.float32)

    if has_tail or has_skip:
        last_valid = num_valid_blocks - 1
        # Steady state: full valid blocks take the unmasked VPU+EUP-only path.
        full_cond = (g < last_valid) if has_tail else (g <= last_valid)

        @pl.when(full_cond)
        def _():
            accumulate(x)

        if has_tail:
            # Only the single partial tail block pays for iota/compare/where.
            @pl.when(g == last_valid)
            def _():
                row = g * block_rows + jax.lax.broadcasted_iota(
                    jnp.int32, x.shape, 0)
                accumulate(jnp.where(row < valid_rows, x, jnp.float32(1.0)))
        # Blocks with g > last_valid (grid padding on the 2nd core) add nothing.
    else:
        accumulate(x)

    @pl.when(i == blocks_per_core - 1)
    def _():
        # Single 1-vreg finalize reduction + negation (per-core partial).
        o_ref[0, 0] = -jnp.sum(acc_ref[...])


def hloss(x, *, tile_rows=8192, lanes=_LANES):
    """Computes -sum(x * log(x)) with a Pallas TPU streaming-reduction kernel."""
    orig_dtype = x.dtype
    flat = x.reshape(-1)
    n = flat.shape[0]

    itemsize = jnp.dtype(x.dtype).itemsize
    # Native sublane tile: 8 rows for 4-byte, 16 for 2-byte, 32 for 1-byte dtypes.
    sublane = max(_ACC_SUBLANES, 32 // itemsize)

    # Pad only to a lane-dense, sublane-aligned [rows, 128] slab.  Pad value 1.0
    # contributes 1*log(1) = 0.  No-op for the common already-aligned case.
    pad = (-n) % (sublane * lanes)
    if pad:
        flat = jnp.pad(flat, (0, pad), constant_values=1.0)
    rows = flat.shape[0] // lanes
    mat = flat.reshape(rows, lanes)

    # Row-block size: ~4 MiB f32 per block (8 MiB double-buffered input) hides
    # per-grid-step overhead on all generations; multiple of the sublane tile.
    block_rows = min(tile_rows, rows)
    block_rows -= block_rows % sublane
    block_rows = max(block_rows, sublane)

    num_valid_blocks = pl.cdiv(rows, block_rows)      # blocks with real data
    has_tail = (rows % block_rows) != 0               # last valid block partial

    # Two partial sums so v7x can shard row-blocks across both TensorCores.
    # Correct (and essentially free) on 1-TC chips: the "parallel" axis just
    # becomes a short sequential outer loop.
    num_cores = 2 if num_valid_blocks >= 2 else 1
    blocks_per_core = pl.cdiv(num_valid_blocks, num_cores)
    has_skip = num_cores * blocks_per_core > num_valid_blocks

    if has_skip:
        # Clamp grid-padding blocks to the last valid block (kernel skips them).
        def x_index_map(c, i):
            return (jnp.minimum(c * blocks_per_core + i, num_valid_blocks - 1), 0)
    else:
        def x_index_map(c, i):
            return (c * blocks_per_core + i, 0)

    kernel = functools.partial(
        _hloss_kernel,
        block_rows=block_rows,
        valid_rows=rows,
        blocks_per_core=blocks_per_core,
        num_valid_blocks=num_valid_blocks,
        has_tail=has_tail,
        has_skip=has_skip,
    )

    cost = pl.CostEstimate(
        flops=2 * n,                                   # mul + add per element
        transcendentals=n,                             # one log per element
        bytes_accessed=itemsize * rows * lanes + 4 * num_cores,
    )

    partials = pl.pallas_call(
        kernel,
        out_shape=jax.ShapeDtypeStruct((num_cores, 1), jnp.float32),
        grid_spec=pltpu.PrefetchScalarGridSpec(
            num_scalar_prefetch=0,
            grid=(num_cores, blocks_per_core),
            in_specs=[pl.BlockSpec((block_rows, lanes), x_index_map)],
            out_specs=pl.BlockSpec(
                (1, 1), lambda c, i: (c, 0), memory_space=pltpu.SMEM
            ),
            # One f32 vreg accumulator (4 KiB) instead of a block-sized buffer.
            scratch_shapes=[pltpu.VMEM((_ACC_SUBLANES, lanes), jnp.float32)],
        ),
        compiler_params=pltpu.CompilerParams(
            dimension_semantics=("parallel", "arbitrary"),
            vmem_limit_bytes=32 * 1024 * 1024,
        ),
        cost_estimate=cost,
    )(mat)
    return jnp.sum(partials).astype(orig_dtype)


def hloss_ref(x):
    xf = x.astype(jnp.float32)
    return (-jnp.sum(xf * jnp.log(xf))).astype(x.dtype)


if __name__ == "__main__":
    key = jax.random.PRNGKey(0)
    key_a, key_b = jax.random.split(key)

    # Primary test: strictly positive inputs (log requires x > 0), NCHW-like.
    x = jax.random.uniform(
        key_a, (2, 4, 16, 16), dtype=jnp.float32, minval=0.05, maxval=1.0
    )
    out = hloss(x)
    jax.block_until_ready(out)
    ref = hloss_ref(x)
    assert jnp.allclose(out, ref, rtol=1e-5, atol=1e-5), (out, ref)

    # Secondary tests: exercise the multi-block, grid-padding (odd block count)
    # and partial-tail-mask paths with small forced tile sizes.
    x2 = jax.random.uniform(
        key_b, (3, 3, 16, 16), dtype=jnp.float32, minval=0.05, maxval=1.0
    )
    ref2 = hloss_ref(x2)
    for tr in (8, 16):
        out2 = hloss(x2, tile_rows=tr)
        jax.block_until_ready(out2)
        assert jnp.allclose(out2, ref2, rtol=1e-5, atol=1e-5), (tr, out2, ref2)

    print("KERNEL_OK")
</pallas_src>

<mosaic_0001>
module attributes {stable_mosaic.version = 11 : i64} {
  func.func @_hloss_kernel(%arg0: i32, %arg1: i32, %arg2: memref<16x128xf32, #tpu.memory_space<vmem>>, %arg3: memref<1x1xf32, #tpu.memory_space<smem>>, %arg4: memref<8x128xf32, #tpu.memory_space<vmem>>) attributes {dimension_semantics = [#tpu.dimension_semantics<parallel>, #tpu.dimension_semantics<arbitrary>], iteration_bounds = array<i64: 1, 1>, scalar_prefetch = 0 : i64, scratch_operands = 1 : i64, tpu.core_type = #tpu.core_type<tc>, window_params = [{transform_indices = @transform_0, window_bounds = array<i64: 16, 128>}, {transform_indices = @transform_1, window_bounds = array<i64: 1, 1>}]} {
    %c0_i32 = arith.constant 0 : i32
    %0 = arith.cmpi eq, %arg1, %c0_i32 : i32
    %1 = arith.extui %0 : i1 to i32
    %c0_i32_0 = arith.constant 0 : i32
    %2 = arith.cmpi ne, %1, %c0_i32_0 : i32
    scf.if %2 {
      %cst_8 = arith.constant 0.000000e+00 : f32
      %14 = vector.broadcast %cst_8 : f32 to vector<8x128xf32>
      %c0_9 = arith.constant 0 : index
      %c0_10 = arith.constant 0 : index
      %15 = vector.load %arg4[%c0_9, %c0_10] : memref<8x128xf32, #tpu.memory_space<vmem>>, vector<8x128xf32>
      tpu.vector_store %arg4[%c0_9, %c0_10], %14 {strides = array<i32>} : memref<8x128xf32, #tpu.memory_space<vmem>>, vector<8x128xf32>,
    } else {
    }
    %c0 = arith.constant 0 : index
    %c0_1 = arith.constant 0 : index
    %3 = vector.load %arg2[%c0, %c0_1] : memref<16x128xf32, #tpu.memory_space<vmem>>, vector<16x128xf32>
    %4 = math.log %3 : vector<16x128xf32>
    %5 = arith.mulf %3, %4 : vector<16x128xf32>
    %c0_2 = arith.constant 0 : index
    %c0_3 = arith.constant 0 : index
    %6 = vector.load %arg4[%c0_2, %c0_3] : memref<8x128xf32, #tpu.memory_space<vmem>>, vector<8x128xf32>
    %7 = vector.shape_cast %5 : vector<16x128xf32> to vector<2x8x128xf32>
    %cst = arith.constant dense<0.000000e+00> : vector<8x128xf32>
    %8 = vector.multi_reduction <add>, %7, %cst [0] : vector<2x8x128xf32> to vector<8x128xf32>
    %9 = arith.addf %6, %8 : vector<8x128xf32>
    %c0_4 = arith.constant 0 : index
    %c0_5 = arith.constant 0 : index
    %10 = vector.load %arg4[%c0_4, %c0_5] : memref<8x128xf32, #tpu.memory_space<vmem>>, vector<8x128xf32>
    tpu.vector_store %arg4[%c0_4, %c0_5], %9 {strides = array<i32>} : memref<8x128xf32, #tpu.memory_space<vmem>>, vector<8x128xf32>,
    %c0_i32_6 = arith.constant 0 : i32
    %11 = arith.cmpi eq, %arg1, %c0_i32_6 : i32
    %12 = arith.extui %11 : i1 to i32
    %c0_i32_7 = arith.constant 0 : i32
    %13 = arith.cmpi ne, %12, %c0_i32_7 : i32
    scf.if %13 {
      %c0_8 = arith.constant 0 : index
      %c0_9 = arith.constant 0 : index
      %14 = vector.load %arg4[%c0_8, %c0_9] : memref<8x128xf32, #tpu.memory_space<vmem>>, vector<8x128xf32>
      %15 = vector.shape_cast %14 : vector<8x128xf32> to vector<1x8x128xf32>
      %cst_10 = arith.constant dense<0.000000e+00> : vector<1xf32>
      %16 = vector.multi_reduction <add>, %15, %cst_10 [1, 2] : vector<1x8x128xf32> to vector<1xf32>
      %17 = vector.shape_cast %16 : vector<1xf32> to vector<1x1x1xf32>
      %18 = vector.extract %17[0, 0, 0] : f32 from vector<1x1x1xf32>
      %cst_11 = arith.constant 0.000000e+00 : f32
      %19 = arith.subf %cst_11, %18 : f32
      %c0_12 = arith.constant 0 : index
      %c0_13 = arith.constant 0 : index
      %20 = memref.load %arg3[%c0_12, %c0_13] : memref<1x1xf32, #tpu.memory_space<smem>>
      memref.store %19, %arg3[%c0_12, %c0_13] : memref<1x1xf32, #tpu.memory_space<smem>>
    } else {
    }
    return
  }
  func.func @transform_0(%arg0: i32, %arg1: i32) -> (i32, i32) {
    %c1_i32 = arith.constant 1 : i32
    %0 = arith.muli %arg0, %c1_i32 : i32
    %1 = arith.addi %0, %arg1 : i32
    %c0_i32 = arith.constant 0 : i32
    %c0_i32_0 = arith.constant 0 : i32
    return %1, %c0_i32 : i32, i32
  }
  func.func @transform_1(%arg0: i32, %arg1: i32) -> (i32, i32) {
    %c0_i32 = arith.constant 0 : i32
    %c0_i32_0 = arith.constant 0 : i32
    return %arg0, %c0_i32 : i32, i32
  }
}

</mosaic_0001>

<llo_original>
// kernel: tpu_custom_call.1
$region0: #{tpu_custom_call.1}
  #allocation0 [shape = 'u32[]', space=smem, size = 0x4, offset = 0x4, fixed_abs, tag = 'smem constant byte address 0x4 - core index']
  #allocation1 [shape = 'u32[72,128]{1,0:T(1,128)}', space=vmem, size = 0x9000, scoped, tag = 'internal scratch']
  #allocation2 [shape = 'f32[8,128]{1,0:T(8,128)}', space=vmem, size = 0x1000, scoped, tag = 'scratch operand']
  %s0 = inlined_call_operand.hbm [shape: f32[16,128], index: 0, kind: input, shape index: {}]
  %s1 = inlined_call_operand.hbm [shape: f32[1,1], index: 1, kind: output, shape index: {}]
  %s2 = sld [smem:[#allocation0]]
  $region26: #{tpu_custom_call.1} parent=0
    _
  %s4 = ssub.s32 1, %s2
  %s5 = scalar_select 0, %s4, %s2
  $region1: #{tpu_custom_call.1} parent=0
    #allocation3 [shape = 'u8[8192]{0}', space=vmem, size = 0x2000, scoped, tag = 'input window, operand 0, single buffered']
    #allocation4 [shape = 's32[1]{0}', space=sflag, size = 0x4, scoped, tag = 'scoped memory for tpu_custom_call.1']
    #allocation5 [shape = 's32[1]{0}', space=sflag, size = 0x4, scoped, tag = 'scoped memory for tpu_custom_call.1']
    #allocation6 [shape = 'u8[512]{0}', space=smem, size = 0x200, scoped, tag = 'output window, operand 0, single buffered']
    %6 = vsyncpa [#allocation4], 0
    %7 = vsyncpa [#allocation5], 0
    // Predicated region
    $region2: #{tpu_custom_call.1} parent=1 // pred_check
      _
    $region3: #{tpu_custom_call.1} parent=1 // pred_check_branch
      %9 = sbr.rel (0) target = $region5
    $region4: #{tpu_custom_call.1} parent=1 // pred_region
      %s10 = sadd.s32 0, 0
      %s11 = smul.u32 2, %s10
      %13 = vsyncadd [#allocation4], 0
      %s14 = smul.addr %s11, 8
      %s15 = scalar_lea.hbm %s0, %s14
      %s16 = sshll.u32 %s15, 4
      %s17 = int_to_ptr.hbm [resolvable:$true] %s16
      %s18 = sshll.u32 [#allocation3], 4
      %s19 = int_to_ptr.vmem [resolvable:$true] %s18
      %24 = dma.hbm_to_vmem [thread:$0]  %s17, 256, %s19, [#allocation4], 128, 128, 8
    $region5: #{tpu_custom_call.1} parent=1 // pred_fallthru
      _
    // Predicated region
    $region6: #{tpu_custom_call.1} parent=1 // pred_check
      _
    $region7: #{tpu_custom_call.1} parent=1 // pred_check_branch
      %26 = sbr.rel (0) target = $region9
    $region8: #{tpu_custom_call.1} parent=1 // pred_region
      %28 = dma.done [#allocation4], 256
    $region9: #{tpu_custom_call.1} parent=1 // pred_fallthru
      _
    %s29 = sadd.s32 0, 0
    %s30 = smul.u32 2, %s29
    %p31 = scmp.eq.s32.totalorder 0, 0
    // Predicated region
    $region10: #{tpu_custom_call.1} parent=1 // pred_check
      %p32 = pneg %p31
    $region11: #{tpu_custom_call.1} parent=1 // pred_check_branch
      %34 = sbr.rel (%p32) target = $region13
    $region12: #{tpu_custom_call.1} parent=1 // pred_region
      %35 = vst [vmem:[#allocation2] sm:$0xff] 0.0
    $region13: #{tpu_custom_call.1} parent=1 // pred_fallthru
      _
    %v36 = vld [vmem:[#allocation3] sm:$0xff]
    %v37 = vld [vmem:[#allocation3 + $0x8] sm:$0xff]
    %v38 = vlog2.pop %v36
    %v39 = vmul.f32 %v38, 0.6931472
    %v40 = vlog2.pop %v37
    %v41 = vmul.f32 %v40, 0.6931472
    %v42 = vmul.f32 %v36, %v39
    %v43 = vmul.f32 %v37, %v41
    %v44 = vld [vmem:[#allocation2] sm:$0xff]
    %v45 = vadd.f32 %v42, %v43
    %v46 = vadd.f32 %v44, %v45
    %47 = vst [vmem:[#allocation2] sm:$0xff] %v46
    // Predicated region
    $region14: #{tpu_custom_call.1} parent=1 // pred_check
      %p48 = pneg %p31
    $region15: #{tpu_custom_call.1} parent=1 // pred_check_branch
      %50 = sbr.rel (%p48) target = $region17
    $region16: #{tpu_custom_call.1} parent=1 // pred_region
      %v51 = vld [vmem:[#allocation2] sm:$0xff]
      %52 = vadd.xlane.f32.xlu0 %v51
      %v53 = vpop.xlane.xlu0 %52
      %v54 = vrot.slane %v53, 4
      %v55 = vadd.f32 %v53, %v54
      %v56 = vrot.slane %v55, 2
      %v57 = vadd.f32 %v55, %v56
      %v58 = vrot.slane %v57, 1
      %v59 = vadd.f32 %v57, %v58
      %s60 = vtos %v59
      %s61 = ssub.f32 0.0, %s60
      %s62 = scalar_lea.smem [#allocation6], 0
      %63 = sst [smem:[%s62]] %s61
    $region17: #{tpu_custom_call.1} parent=1 // pred_fallthru
      _
    // Predicated region
    $region18: #{tpu_custom_call.1} parent=1 // pred_check
      _
    $region19: #{tpu_custom_call.1} parent=1 // pred_check_branch
      %65 = sbr.rel (0) target = $region21
    $region20: #{tpu_custom_call.1} parent=1 // pred_region
      %67 = vsyncadd [#allocation5], 0
      %s69 = sshll.u32 %s1, 4
      %s70 = int_to_ptr.hbm [resolvable:$true] %s69
      %72 = dma.smem_to_hbm [#allocation6], 16, %s70, [#allocation5]
    $region21: #{tpu_custom_call.1} parent=1 // pred_fallthru
      _
    // Predicated region
    $region22: #{tpu_custom_call.1} parent=1 // pred_check
      _
    $region23: #{tpu_custom_call.1} parent=1 // pred_check_branch
      %74 = sbr.rel (0) target = $region25
    $region24: #{tpu_custom_call.1} parent=1 // pred_region
      %76 = dma.done [#allocation5], 16
    $region25: #{tpu_custom_call.1} parent=1 // pred_fallthru
      _
    %77 = sfence
    %78 = vsyncpa [#allocation4], 1
    %79 = vsyncpa [#allocation5], 1

</llo_original>
